<compile_context>
chip_gen: v7x
topology: tpu7x:2x2x1
jax: 0.10.0
libtpu: 0.0.40
codegen_flags: <defaults>
</compile_context>

<pallas_src>
import jax
import jax.numpy as jnp
from jax.experimental import pallas as pl
from jax.experimental.pallas import tpu as pltpu


def _round_up(a, b):
    return ((a + b - 1) // b) * b


def pacl_kernel(x_ref, w1r_ref, b1_ref, w2_ref, bo_ref, o_ref):
    """One row-tile of the fused PACL embedder.

    x_ref   : (tm, in_pad)
    w1r_ref : (in_pad, 2*out_pad)   -- [W1^T | Wr^T] fused
    b1_ref  : (1, out_pad)
    w2_ref  : (out_pad, out_pad)
    bo_ref  : (1, out_pad)          -- b2 + br folded
    o_ref   : (tm, out_pad)
    """
    d = o_ref.shape[-1]  # out_pad (static, multiple of 128 -> lane-aligned split)
    x = x_ref[...]

    # Single MXU pass over x for both the main and residual branches.
    xw = jnp.dot(x, w1r_ref[...], preferred_element_type=jnp.float32)
    h = jnp.maximum(xw[:, :d] + b1_ref[...], 0.0)     # Linear1 + ReLU
    res = xw[:, d:]                                    # residual Linear (bias folded)

    out = jnp.dot(h, w2_ref[...], preferred_element_type=jnp.float32)
    out = out + bo_ref[...] + res
    o_ref[...] = out.astype(o_ref.dtype)


def pacl_vision_embedder(x, params, *, tm=256):
    """x: (..., in_dim) float32.  params: transposed weights (in,out) + 1-D biases."""
    w1, b1 = params["w1"], params["b1"]
    w2, b2 = params["w2"], params["b2"]
    wr, br = params["wr"], params["br"]

    in_dim, out_dim = w1.shape
    lead_shape = x.shape[:-1]

    # ---- lane-dense padded sizes -------------------------------------------
    in_pad = _round_up(in_dim, 128)
    out_pad = _round_up(out_dim, 128)

    # ---- rows: flatten, choose an effective tile, pad to a tile multiple ----
    x2 = x.reshape(-1, in_dim)
    M = x2.shape[0]
    tm_eff = _round_up(min(tm, _round_up(M, 8)), 8)
    M_pad = _round_up(M, tm_eff)
    x2 = jnp.pad(x2, ((0, M_pad - M), (0, in_pad - in_dim)))

    # ---- pad + fuse parameters (zero padding is exact) ----------------------
    def _pad2(a, r, c):
        return jnp.pad(a, ((0, r - a.shape[0]), (0, c - a.shape[1])))

    w1r = jnp.concatenate(
        [_pad2(w1, in_pad, out_pad), _pad2(wr, in_pad, out_pad)], axis=1
    )                                                   # (in_pad, 2*out_pad)
    w2p = _pad2(w2, out_pad, out_pad)                   # (out_pad, out_pad)
    b1p = jnp.pad(b1, (0, out_pad - out_dim)).reshape(1, out_pad)
    bop = jnp.pad(b2 + br, (0, out_pad - out_dim)).reshape(1, out_pad)

    grid = (M_pad // tm_eff,)

    out = pl.pallas_call(
        pacl_kernel,
        out_shape=jax.ShapeDtypeStruct((M_pad, out_pad), x.dtype),
        grid_spec=pltpu.PrefetchScalarGridSpec(
            num_scalar_prefetch=0,
            grid=grid,
            in_specs=[
                pl.BlockSpec((tm_eff, in_pad), lambda i: (i, 0)),        # x rows
                pl.BlockSpec((in_pad, 2 * out_pad), lambda i: (0, 0)),   # [W1|Wr]
                pl.BlockSpec((1, out_pad), lambda i: (0, 0)),            # b1
                pl.BlockSpec((out_pad, out_pad), lambda i: (0, 0)),      # W2
                pl.BlockSpec((1, out_pad), lambda i: (0, 0)),            # b2+br
            ],
            out_specs=pl.BlockSpec((tm_eff, out_pad), lambda i: (i, 0)),
        ),
        compiler_params=pltpu.CompilerParams(
            dimension_semantics=("parallel",),
            vmem_limit_bytes=64 * 1024 * 1024,
        ),
    )(x2, w1r, b1p, w2p, bop)

    return out[:M, :out_dim].reshape(*lead_shape, out_dim)


def init_params(key, in_dim, out_dim):
    """PyTorch stores Linear weight as (out, in); we init in that convention
    then transpose to (in, out) for the kernel's row-major matmuls."""
    ks = jax.random.split(key, 6)
    w1_t = jax.random.normal(ks[0], (out_dim, in_dim), jnp.float32) * 0.05
    b1 = jax.random.normal(ks[1], (out_dim,), jnp.float32) * 0.05
    w2_t = jax.random.normal(ks[2], (out_dim, out_dim), jnp.float32) * 0.05
    b2 = jax.random.normal(ks[3], (out_dim,), jnp.float32) * 0.05
    wr_t = jax.random.normal(ks[4], (out_dim, in_dim), jnp.float32) * 0.05
    br = jax.random.normal(ks[5], (out_dim,), jnp.float32) * 0.05
    return {
        "w1": w1_t.T, "b1": b1,
        "w2": w2_t.T, "b2": b2,
        "wr": wr_t.T, "br": br,
    }


def reference(x, params):
    h = jnp.maximum(x @ params["w1"] + params["b1"], 0.0)
    main = h @ params["w2"] + params["b2"]
    res = x @ params["wr"] + params["br"]
    return main + res


if __name__ == "__main__":
    key = jax.random.PRNGKey(0)
    kx, kp = jax.random.split(key)

    in_dim, out_dim = 32, 32
    batch, seq = 2, 8                      # x: (2, 8, 32) -> 16 rows of in_dim
    x = jax.random.normal(kx, (batch, seq, in_dim), jnp.float32)

    params = init_params(kp, in_dim, out_dim)

    y = pacl_vision_embedder(x, params)
    y = jax.block_until_ready(y)

    y_ref = reference(x, params)
    assert y.shape == (batch, seq, out_dim)
    assert jnp.allclose(y, y_ref, atol=1e-5, rtol=1e-5), "mismatch vs reference"

    print("KERNEL_OK")
</pallas_src>

<mosaic_0001>
module attributes {stable_mosaic.version = 11 : i64} {
  func.func @pacl_kernel(%arg0: i32, %arg1: memref<16x128xf32, #tpu.memory_space<vmem>>, %arg2: memref<128x256xf32, #tpu.memory_space<vmem>>, %arg3: memref<1x128xf32, #tpu.memory_space<vmem>>, %arg4: memref<128x128xf32, #tpu.memory_space<vmem>>, %arg5: memref<1x128xf32, #tpu.memory_space<vmem>>, %arg6: memref<16x128xf32, #tpu.memory_space<vmem>>) attributes {dimension_semantics = [#tpu.dimension_semantics<parallel>], iteration_bounds = array<i64: 1>, scalar_prefetch = 0 : i64, scratch_operands = 0 : i64, tpu.core_type = #tpu.core_type<tc>, window_params = [{transform_indices = @transform_0, window_bounds = array<i64: 16, 128>}, {pipeline_mode = #tpu.pipeline_mode<synchronous>, transform_indices = @transform_1, window_bounds = array<i64: 128, 256>}, {pipeline_mode = #tpu.pipeline_mode<synchronous>, transform_indices = @transform_2, window_bounds = array<i64: 1, 128>}, {pipeline_mode = #tpu.pipeline_mode<synchronous>, transform_indices = @transform_3, window_bounds = array<i64: 128, 128>}, {pipeline_mode = #tpu.pipeline_mode<synchronous>, transform_indices = @transform_4, window_bounds = array<i64: 1, 128>}, {transform_indices = @transform_5, window_bounds = array<i64: 16, 128>}]} {
    %c0 = arith.constant 0 : index
    %c0_0 = arith.constant 0 : index
    %0 = vector.load %arg1[%c0, %c0_0] : memref<16x128xf32, #tpu.memory_space<vmem>>, vector<16x128xf32>
    %c0_1 = arith.constant 0 : index
    %c0_2 = arith.constant 0 : index
    %1 = vector.load %arg2[%c0_1, %c0_2] : memref<128x256xf32, #tpu.memory_space<vmem>>, vector<128x256xf32>
    %cst = arith.constant dense<0.000000e+00> : vector<16x256xf32>
    %2 = tpu.matmul %0, %1, %cst {dimension_numbers = #tpu.dot_dimension_numbers<[1], [0], [0], [1], [0, 0, 1, 1], [], []>} : vector<16x128xf32>, vector<128x256xf32>, vector<16x256xf32> -> vector<16x256xf32>
    %3 = vector.extract_strided_slice %2 {offsets = [0, 0], sizes = [16, 128], strides = [1, 1]} : vector<16x256xf32> to vector<16x128xf32>
    %c0_3 = arith.constant 0 : index
    %c0_4 = arith.constant 0 : index
    %4 = vector.load %arg3[%c0_3, %c0_4] : memref<1x128xf32, #tpu.memory_space<vmem>>, vector<1x128xf32>
    %5 = vector.broadcast %4 : vector<1x128xf32> to vector<16x128xf32>
    %6 = arith.addf %3, %5 : vector<16x128xf32>
    %cst_5 = arith.constant 0.000000e+00 : f32
    %7 = vector.broadcast %cst_5 : f32 to vector<16x128xf32>
    %8 = arith.maximumf %6, %7 : vector<16x128xf32>
    %9 = vector.extract_strided_slice %2 {offsets = [0, 128], sizes = [16, 128], strides = [1, 1]} : vector<16x256xf32> to vector<16x128xf32>
    %c0_6 = arith.constant 0 : index
    %c0_7 = arith.constant 0 : index
    %10 = vector.load %arg4[%c0_6, %c0_7] : memref<128x128xf32, #tpu.memory_space<vmem>>, vector<128x128xf32>
    %cst_8 = arith.constant dense<0.000000e+00> : vector<16x128xf32>
    %11 = tpu.matmul %8, %10, %cst_8 {dimension_numbers = #tpu.dot_dimension_numbers<[1], [0], [0], [1], [0, 0, 1, 1], [], []>} : vector<16x128xf32>, vector<128x128xf32>, vector<16x128xf32> -> vector<16x128xf32>
    %c0_9 = arith.constant 0 : index
    %c0_10 = arith.constant 0 : index
    %12 = vector.load %arg5[%c0_9, %c0_10] : memref<1x128xf32, #tpu.memory_space<vmem>>, vector<1x128xf32>
    %13 = vector.broadcast %12 : vector<1x128xf32> to vector<16x128xf32>
    %14 = arith.addf %11, %13 : vector<16x128xf32>
    %15 = arith.addf %14, %9 : vector<16x128xf32>
    %c0_11 = arith.constant 0 : index
    %c0_12 = arith.constant 0 : index
    %16 = vector.load %arg6[%c0_11, %c0_12] : memref<16x128xf32, #tpu.memory_space<vmem>>, vector<16x128xf32>
    tpu.vector_store %arg6[%c0_11, %c0_12], %15 {strides = array<i32>} : memref<16x128xf32, #tpu.memory_space<vmem>>, vector<16x128xf32>,
    return
  }
  func.func @transform_0(%arg0: i32) -> (i32, i32) {
    %c0_i32 = arith.constant 0 : i32
    %c0_i32_0 = arith.constant 0 : i32
    return %arg0, %c0_i32 : i32, i32
  }
  func.func @transform_1(%arg0: i32) -> (i32, i32) {
    %c0_i32 = arith.constant 0 : i32
    %c0_i32_0 = arith.constant 0 : i32
    %c0_i32_1 = arith.constant 0 : i32
    return %c0_i32, %c0_i32_0 : i32, i32
  }
  func.func @transform_2(%arg0: i32) -> (i32, i32) {
    %c0_i32 = arith.constant 0 : i32
    %c0_i32_0 = arith.constant 0 : i32
    %c0_i32_1 = arith.constant 0 : i32
    return %c0_i32, %c0_i32_0 : i32, i32
  }
  func.func @transform_3(%arg0: i32) -> (i32, i32) {
    %c0_i32 = arith.constant 0 : i32
    %c0_i32_0 = arith.constant 0 : i32
    %c0_i32_1 = arith.constant 0 : i32
    return %c0_i32, %c0_i32_0 : i32, i32
  }
  func.func @transform_4(%arg0: i32) -> (i32, i32) {
    %c0_i32 = arith.constant 0 : i32
    %c0_i32_0 = arith.constant 0 : i32
    %c0_i32_1 = arith.constant 0 : i32
    return %c0_i32, %c0_i32_0 : i32, i32
  }
  func.func @transform_5(%arg0: i32) -> (i32, i32) {
    %c0_i32 = arith.constant 0 : i32
    %c0_i32_0 = arith.constant 0 : i32
    return %arg0, %c0_i32 : i32, i32
  }
}

</mosaic_0001>

<llo_original>
// kernel: tpu_custom_call.1
$region0: #{tpu_custom_call.1}
  #allocation0 [shape = 'u32[]', space=smem, size = 0x4, offset = 0x4, fixed_abs, tag = 'smem constant byte address 0x4 - core index']
  #allocation1 [shape = 'u32[144,128]{1,0:T(1,128)}', space=vmem, size = 0x12000, scoped, tag = 'internal scratch']
  %s0 = inlined_call_operand.hbm [shape: f32[16,128], index: 0, kind: input, shape index: {}]
  %s1 = inlined_call_operand.hbm [shape: f32[128,256], index: 1, kind: input, shape index: {}]
  %s2 = inlined_call_operand.hbm [shape: f32[1,128], index: 2, kind: input, shape index: {}]
  %s3 = inlined_call_operand.hbm [shape: f32[128,128], index: 3, kind: input, shape index: {}]
  %s4 = inlined_call_operand.hbm [shape: f32[1,128], index: 4, kind: input, shape index: {}]
  %s5 = inlined_call_operand.hbm [shape: f32[16,128], index: 5, kind: output, shape index: {}]
  %s6 = sld [smem:[#allocation0]]
  $region50: #{tpu_custom_call.1} parent=0
    _
  %s8 = ssub.s32 1, %s6
  %s9 = scalar_select 0, %s8, %s6
  $region1: #{tpu_custom_call.1} parent=0
    #allocation2 [shape = 'u8[8192]{0}', space=vmem, size = 0x2000, scoped, tag = 'input window, operand 0, single buffered']
    #allocation3 [shape = 's32[1]{0}', space=sflag, size = 0x4, scoped, tag = 'scoped memory for tpu_custom_call.1']
    #allocation4 [shape = 's32[1]{0}', space=sflag, size = 0x4, scoped, tag = 'scoped memory for tpu_custom_call.1']
    #allocation5 [shape = 'u8[131072]{0}', space=vmem, size = 0x20000, scoped, tag = 'input window, operand 1, single buffered']
    #allocation6 [shape = 's32[1]{0}', space=sflag, size = 0x4, scoped, tag = 'scoped memory for tpu_custom_call.1']
    #allocation7 [shape = 'u8[512]{0}', space=vmem, size = 0x400, scoped, tag = 'input window, operand 2, single buffered']
    #allocation8 [shape = 'u8[65536]{0}', space=vmem, size = 0x10000, scoped, tag = 'input window, operand 3, single buffered']
    #allocation9 [shape = 's32[1]{0}', space=sflag, size = 0x4, scoped, tag = 'scoped memory for tpu_custom_call.1']
    #allocation10 [shape = 'u8[512]{0}', space=vmem, size = 0x400, scoped, tag = 'input window, operand 4, single buffered']
    #allocation11 [shape = 'u8[8192]{0}', space=vmem, size = 0x2000, scoped, tag = 'output window, operand 0, single buffered']
    %10 = vsyncpa [#allocation3], 0
    %11 = vsyncpa [#allocation6], 0
    %12 = vsyncpa [#allocation9], 0
    %13 = vsyncpa [#allocation4], 0
    // Predicated region
    $region2: #{tpu_custom_call.1} parent=1 // pred_check
      _
    $region3: #{tpu_custom_call.1} parent=1 // pred_check_branch
      %15 = sbr.rel (0) target = $region5
    $region4: #{tpu_custom_call.1} parent=1 // pred_region
      %s17 = ssub.s32 256, 256
      %18 = vsyncadd [#allocation3], %s17
      %s19 = sshll.u32 [#allocation2], 4
      %s20 = int_to_ptr.vmem [resolvable:$true] %s19
      %25 = dma.hbm_to_vmem [thread:$0]  %s0, 256, %s20, [#allocation3], 128, 128, 8
    $region5: #{tpu_custom_call.1} parent=1 // pred_fallthru
      _
    // Predicated region
    $region6: #{tpu_custom_call.1} parent=1 // pred_check
      _
    $region7: #{tpu_custom_call.1} parent=1 // pred_check_branch
      %27 = sbr.rel (0) target = $region9
    $region8: #{tpu_custom_call.1} parent=1 // pred_region
      %s29 = ssub.s32 4096, 4096
      %30 = vsyncadd [#allocation6], %s29
      %s31 = sshll.u32 [#allocation5], 4
      %s32 = int_to_ptr.vmem [resolvable:$true] %s31
      %37 = dma.hbm_to_vmem [thread:$0]  %s1, 4096, %s32, [#allocation6], 256, 256, 16
    $region9: #{tpu_custom_call.1} parent=1 // pred_fallthru
      _
    // Predicated region
    $region10: #{tpu_custom_call.1} parent=1 // pred_check
      _
    $region11: #{tpu_custom_call.1} parent=1 // pred_check_branch
      %39 = sbr.rel (0) target = $region13
    $region12: #{tpu_custom_call.1} parent=1 // pred_region
      %s41 = ssub.s32 16, 16
      %42 = vsyncadd [#allocation6], %s41
      %s44 = sshll.u32 [#allocation7], 4
      %s45 = int_to_ptr.vmem [resolvable:$true] %s44
      %47 = dma.hbm_to_vmem [thread:$0]  %s2, 16, %s45, [#allocation6]
    $region13: #{tpu_custom_call.1} parent=1 // pred_fallthru
      _
    // Predicated region
    $region14: #{tpu_custom_call.1} parent=1 // pred_check
      _
    $region15: #{tpu_custom_call.1} parent=1 // pred_check_branch
      %49 = sbr.rel (0) target = $region17
    $region16: #{tpu_custom_call.1} parent=1 // pred_region
      %s51 = ssub.s32 2048, 2048
      %52 = vsyncadd [#allocation9], %s51
      %s53 = sshll.u32 [#allocation8], 4
      %s54 = int_to_ptr.vmem [resolvable:$true] %s53
      %59 = dma.hbm_to_vmem [thread:$0]  %s3, 2048, %s54, [#allocation9], 128, 128, 8
    $region17: #{tpu_custom_call.1} parent=1 // pred_fallthru
      _
    // Predicated region
    $region18: #{tpu_custom_call.1} parent=1 // pred_check
      _
    $region19: #{tpu_custom_call.1} parent=1 // pred_check_branch
      %61 = sbr.rel (0) target = $region21
    $region20: #{tpu_custom_call.1} parent=1 // pred_region
      %s63 = ssub.s32 16, 16
      %64 = vsyncadd [#allocation9], %s63
      %s66 = sshll.u32 [#allocation10], 4
      %s67 = int_to_ptr.vmem [resolvable:$true] %s66
      %69 = dma.hbm_to_vmem [thread:$0]  %s4, 16, %s67, [#allocation9]
    $region21: #{tpu_custom_call.1} parent=1 // pred_fallthru
      _
    // Predicated region
    $region22: #{tpu_custom_call.1} parent=1 // pred_check
      _
    $region23: #{tpu_custom_call.1} parent=1 // pred_check_branch
      %71 = sbr.rel (0) target = $region25
    $region24: #{tpu_custom_call.1} parent=1 // pred_region
      %72 = dma.done [#allocation3], 256
    $region25: #{tpu_custom_call.1} parent=1 // pred_fallthru
      _
    // Predicated region
    $region26: #{tpu_custom_call.1} parent=1 // pred_check
      _
    $region27: #{tpu_custom_call.1} parent=1 // pred_check_branch
      %74 = sbr.rel (0) target = $region29
    $region28: #{tpu_custom_call.1} parent=1 // pred_region
      %75 = dma.done [#allocation6], 4096
    $region29: #{tpu_custom_call.1} parent=1 // pred_fallthru
      _
    // Predicated region
    $region30: #{tpu_custom_call.1} parent=1 // pred_check
      _
    $region31: #{tpu_custom_call.1} parent=1 // pred_check_branch
      %77 = sbr.rel (0) target = $region33
    $region32: #{tpu_custom_call.1} parent=1 // pred_region
      %78 = dma.done [#allocation6], 16
    $region33: #{tpu_custom_call.1} parent=1 // pred_fallthru
      _
    // Predicated region
    $region34: #{tpu_custom_call.1} parent=1 // pred_check
      _
    $region35: #{tpu_custom_call.1} parent=1 // pred_check_branch
      %80 = sbr.rel (0) target = $region37
    $region36: #{tpu_custom_call.1} parent=1 // pred_region
      %81 = dma.done [#allocation9], 2048
    $region37: #{tpu_custom_call.1} parent=1 // pred_fallthru
      _
    // Predicated region
    $region38: #{tpu_custom_call.1} parent=1 // pred_check
      _
    $region39: #{tpu_custom_call.1} parent=1 // pred_check_branch
      %83 = sbr.rel (0) target = $region41
    $region40: #{tpu_custom_call.1} parent=1 // pred_region
      %84 = dma.done [#allocation9], 16
    $region41: #{tpu_custom_call.1} parent=1 // pred_fallthru
      _
    %v85 = vld [vmem:[#allocation2] sm:$0xff]
    %v86 = vld [vmem:[#allocation2 + $0x8] sm:$0xff]
    %v87 = vld [vmem:[#allocation5] sm:$0xff]
    %v88 = vld [vmem:[#allocation5 + $0x8] sm:$0xff]
    %v89 = vld [vmem:[#allocation5 + $0x10] sm:$0xff]
    %v90 = vld [vmem:[#allocation5 + $0x18] sm:$0xff]
    %v91 = vld [vmem:[#allocation5 + $0x20] sm:$0xff]
    %v92 = vld [vmem:[#allocation5 + $0x28] sm:$0xff]
    %v93 = vld [vmem:[#allocation5 + $0x30] sm:$0xff]
    %v94 = vld [vmem:[#allocation5 + $0x38] sm:$0xff]
    %v95 = vld [vmem:[#allocation5 + $0x40] sm:$0xff]
    %v96 = vld [vmem:[#allocation5 + $0x48] sm:$0xff]
    %v97 = vld [vmem:[#allocation5 + $0x50] sm:$0xff]
    %v98 = vld [vmem:[#allocation5 + $0x58] sm:$0xff]
    %v99 = vld [vmem:[#allocation5 + $0x60] sm:$0xff]
    %v100 = vld [vmem:[#allocation5 + $0x68] sm:$0xff]
    %v101 = vld [vmem:[#allocation5 + $0x70] sm:$0xff]
    %v102 = vld [vmem:[#allocation5 + $0x78] sm:$0xff]
    %v103 = vld [vmem:[#allocation5 + $0x80] sm:$0xff]
    %v104 = vld [vmem:[#allocation5 + $0x88] sm:$0xff]
    %v105 = vld [vmem:[#allocation5 + $0x90] sm:$0xff]
    %v106 = vld [vmem:[#allocation5 + $0x98] sm:$0xff]
    %v107 = vld [vmem:[#allocation5 + $0xa0] sm:$0xff]
    %v108 = vld [vmem:[#allocation5 + $0xa8] sm:$0xff]
    %v109 = vld [vmem:[#allocation5 + $0xb0] sm:$0xff]
    %v110 = vld [vmem:[#allocation5 + $0xb8] sm:$0xff]
    %v111 = vld [vmem:[#allocation5 + $0xc0] sm:$0xff]
    %v112 = vld [vmem:[#allocation5 + $0xc8] sm:$0xff]
    %v113 = vld [vmem:[#allocation5 + $0xd0] sm:$0xff]
    %v114 = vld [vmem:[#allocation5 + $0xd8] sm:$0xff]
    %v115 = vld [vmem:[#allocation5 + $0xe0] sm:$0xff]
    %v116 = vld [vmem:[#allocation5 + $0xe8] sm:$0xff]
    %v117 = vld [vmem:[#allocation5 + $0xf0] sm:$0xff]
    %v118 = vld [vmem:[#allocation5 + $0xf8] sm:$0xff]
    %119 = vmatprep.subr.mxu0 %v88
    %120 = vmatpush1.msra.mxu0 %v87
    %121 = vmatprep.subr.mxu0 %v90
    %122 = vmatpush1.msra.mxu0 %v89
    %123 = vmatprep.subr.mxu0 %v92
    %124 = vmatpush1.msra.mxu0 %v91
    %125 = vmatprep.subr.mxu0 %v94
    %126 = vmatpush1.msra.mxu0 %v93
    %127 = vmatprep.subr.mxu0 %v96
    %128 = vmatpush1.msra.mxu0 %v95
    %129 = vmatprep.subr.mxu0 %v98
    %130 = vmatpush1.msra.mxu0 %v97
    %131 = vmatprep.subr.mxu0 %v100
    %132 = vmatpush1.msra.mxu0 %v99
    %133 = vmatprep.subr.mxu0 %v102
    %134 = vmatpush1.msra.mxu0 %v101
    %135 = vmatprep.subr.mxu0 %v104
    %136 = vmatpush1.msra.mxu0 %v103
    %137 = vmatprep.subr.mxu0 %v106
    %138 = vmatpush1.msra.mxu0 %v105
    %139 = vmatprep.subr.mxu0 %v108
    %140 = vmatpush1.msra.mxu0 %v107
    %141 = vmatprep.subr.mxu0 %v110
    %142 = vmatpush1.msra.mxu0 %v109
    %143 = vmatprep.subr.mxu0 %v112
    %144 = vmatpush1.msra.mxu0 %v111
    %145 = vmatprep.subr.mxu0 %v114
    %146 = vmatpush1.msra.mxu0 %v113
    %147 = vmatprep.subr.mxu0 %v116
    %148 = vmatpush1.msra.mxu0 %v115
    %149 = vmatprep.subr.mxu0 %v118
    %150 = vmatpush1.msra.mxu0 %v117
    %151 = vmatprep.subr.mxu0 0.0
    %152 = vmatpush1.msra.mxu0 0.0
    %153 = vmatprep.subr.mxu0 0.0
    %154 = vmatpush1.msra.mxu0 0.0
    %155 = vmatprep.subr.mxu0 0.0
    %156 = vmatpush1.msra.mxu0 0.0
    %157 = vmatprep.subr.mxu0 0.0
    %158 = vmatpush1.msra.mxu0 0.0
    %159 = vmatprep.subr.mxu0 0.0
    %160 = vmatpush1.msra.mxu0 0.0
    %161 = vmatprep.subr.mxu0 0.0
    %162 = vmatpush1.msra.mxu0 0.0
    %163 = vmatprep.subr.mxu0 0.0
    %164 = vmatpush1.msra.mxu0 0.0
    %165 = vmatprep.subr.mxu0 0.0
    %166 = vmatpush1.msra.mxu0 0.0
    %167 = vmatprep.subr.mxu0 0.0
    %168 = vmatpush1.msra.mxu0 0.0
    %169 = vmatprep.subr.mxu0 0.0
    %170 = vmatpush1.msra.mxu0 0.0
    %171 = vmatprep.subr.mxu0 0.0
    %172 = vmatpush1.msra.mxu0 0.0
    %173 = vmatprep.subr.mxu0 0.0
    %174 = vmatpush1.msra.mxu0 0.0
    %175 = vmatprep.subr.mxu0 0.0
    %176 = vmatpush1.msra.mxu0 0.0
    %177 = vmatprep.subr.mxu0 0.0
    %178 = vmatpush1.msra.mxu0 0.0
    %179 = vmatprep.subr.mxu0 0.0
    %180 = vmatpush1.msra.mxu0 0.0
    %181 = vmatprep.subr.mxu0 0.0
    %182 = vmatpush1.msra.mxu0 0.0
    %183 = vmatprep.mubr.f32.mxu0 0.0
    %184 = vmatmul.mubr.f32.gmra.mrb[0].mxu0 %v85
    %v185 = vpop.f32.mrb[0].mxu0
    %v186 = vadd.f32 0.0, %v185
    %v187 = vpop.f32.mrb[0].mxu0
    %v188 = vadd.f32 0.0, %v187
    %189 = vmatprep.mubr.f32.mxu0 0.0
    %190 = vmatmul.mubr.f32.gmra.mrb[0].mxu0 %v86
    %v191 = vpop.f32.mrb[0].mxu0
    %v192 = vadd.f32 0.0, %v191
    %v193 = vpop.f32.mrb[0].mxu0
    %v194 = vadd.f32 0.0, %v193
    %195 = vdwg.mxu0
    %v196 = vld [vmem:[#allocation7] sm:$0x1]
    %v198 = vlaneseq
    %v199 = vshrl.u32 %v198, 7
    %v200 = vsub.s32 0, %v199
    %v201 = vrot.slane %v196, %v200
    %v203 = vadd.f32 %v186, %v201
    %v204 = vadd.f32 %v192, %v201
    %v205 = vmax.f32 %v203, 0.0
    %v206 = vmax.f32 %v204, 0.0
    %v207 = vld [vmem:[#allocation8] sm:$0xff]
    %v208 = vld [vmem:[#allocation8 + $0x8] sm:$0xff]
    %v209 = vld [vmem:[#allocation8 + $0x10] sm:$0xff]
    %v210 = vld [vmem:[#allocation8 + $0x18] sm:$0xff]
    %v211 = vld [vmem:[#allocation8 + $0x20] sm:$0xff]
    %v212 = vld [vmem:[#allocation8 + $0x28] sm:$0xff]
    %v213 = vld [vmem:[#allocation8 + $0x30] sm:$0xff]
    %v214 = vld [vmem:[#allocation8 + $0x38] sm:$0xff]
    %v215 = vld [vmem:[#allocation8 + $0x40] sm:$0xff]
    %v216 = vld [vmem:[#allocation8 + $0x48] sm:$0xff]
    %v217 = vld [vmem:[#allocation8 + $0x50] sm:$0xff]
    %v218 = vld [vmem:[#allocation8 + $0x58] sm:$0xff]
    %v219 = vld [vmem:[#allocation8 + $0x60] sm:$0xff]
    %v220 = vld [vmem:[#allocation8 + $0x68] sm:$0xff]
    %v221 = vld [vmem:[#allocation8 + $0x70] sm:$0xff]
    %v222 = vld [vmem:[#allocation8 + $0x78] sm:$0xff]
    %v223 = vld [vmem:[#allocation10] sm:$0x1]
    %v225 = vlaneseq
    %v226 = vshrl.u32 %v225, 7
    %v227 = vsub.s32 0, %v226
    %v228 = vrot.slane %v223, %v227
    %230 = vmatprep.subr.mxu0 0.0
    %231 = vmatpush1.msra.mxu0 %v207
    %232 = vmatprep.subr.mxu0 0.0
    %233 = vmatpush1.msra.mxu0 %v208
    %234 = vmatprep.subr.mxu0 0.0
    %235 = vmatpush1.msra.mxu0 %v209
    %236 = vmatprep.subr.mxu0 0.0
    %237 = vmatpush1.msra.mxu0 %v210
    %238 = vmatprep.subr.mxu0 0.0
    %239 = vmatpush1.msra.mxu0 %v211
    %240 = vmatprep.subr.mxu0 0.0
    %241 = vmatpush1.msra.mxu0 %v212
    %242 = vmatprep.subr.mxu0 0.0
    %243 = vmatpush1.msra.mxu0 %v213
    %244 = vmatprep.subr.mxu0 0.0
    %245 = vmatpush1.msra.mxu0 %v214
    %246 = vmatprep.subr.mxu0 0.0
    %247 = vmatpush1.msra.mxu0 %v215
    %248 = vmatprep.subr.mxu0 0.0
    %249 = vmatpush1.msra.mxu0 %v216
    %250 = vmatprep.subr.mxu0 0.0
    %251 = vmatpush1.msra.mxu0 %v217
    %252 = vmatprep.subr.mxu0 0.0
    %253 = vmatpush1.msra.mxu0 %v218
    %254 = vmatprep.subr.mxu0 0.0
    %255 = vmatpush1.msra.mxu0 %v219
    %256 = vmatprep.subr.mxu0 0.0
    %257 = vmatpush1.msra.mxu0 %v220
    %258 = vmatprep.subr.mxu0 0.0
    %259 = vmatpush1.msra.mxu0 %v221
    %260 = vmatprep.subr.mxu0 0.0
    %261 = vmatpush1.msra.mxu0 %v222
    %262 = vmatprep.subr.mxu0 0.0
    %263 = vmatpush1.msra.mxu0 0.0
    %264 = vmatprep.subr.mxu0 0.0
    %265 = vmatpush1.msra.mxu0 0.0
    %266 = vmatprep.subr.mxu0 0.0
    %267 = vmatpush1.msra.mxu0 0.0
    %268 = vmatprep.subr.mxu0 0.0
    %269 = vmatpush1.msra.mxu0 0.0
    %270 = vmatprep.subr.mxu0 0.0
    %271 = vmatpush1.msra.mxu0 0.0
    %272 = vmatprep.subr.mxu0 0.0
    %273 = vmatpush1.msra.mxu0 0.0
    %274 = vmatprep.subr.mxu0 0.0
    %275 = vmatpush1.msra.mxu0 0.0
    %276 = vmatprep.subr.mxu0 0.0
    %277 = vmatpush1.msra.mxu0 0.0
    %278 = vmatprep.subr.mxu0 0.0
    %279 = vmatpush1.msra.mxu0 0.0
    %280 = vmatprep.subr.mxu0 0.0
    %281 = vmatpush1.msra.mxu0 0.0
    %282 = vmatprep.subr.mxu0 0.0
    %283 = vmatpush1.msra.mxu0 0.0
    %284 = vmatprep.subr.mxu0 0.0
    %285 = vmatpush1.msra.mxu0 0.0
    %286 = vmatprep.subr.mxu0 0.0
    %287 = vmatpush1.msra.mxu0 0.0
    %288 = vmatprep.subr.mxu0 0.0
    %289 = vmatpush1.msra.mxu0 0.0
    %290 = vmatprep.subr.mxu0 0.0
    %291 = vmatpush1.msra.mxu0 0.0
    %292 = vmatprep.subr.mxu0 0.0
    %293 = vmatpush1.msra.mxu0 0.0
    %294 = vmatprep.mubr.f32.mxu0 0.0
    %295 = vmatmul.mubr.f32.gmra.mrb[0].mxu0 %v205
    %v296 = vpop.f32.mrb[0].mxu0
    %v297 = vadd.f32 %v228, %v296
    %v298 = vpop.f32.mrb[0].mxu0
    %299 = vmatprep.mubr.f32.mxu0 0.0
    %300 = vmatmul.mubr.f32.gmra.mrb[0].mxu0 %v206
    %v301 = vpop.f32.mrb[0].mxu0
    %v302 = vadd.f32 %v228, %v301
    %v303 = vpop.f32.mrb[0].mxu0
    %304 = vdwg.mxu0
    %v305 = vadd.f32 %v297, %v188
    %v306 = vadd.f32 %v302, %v194
    %307 = vst [vmem:[#allocation11] sm:$0xff] %v305
    %308 = vst [vmem:[#allocation11 + $0x8] sm:$0xff] %v306
    // Predicated region
    $region42: #{tpu_custom_call.1} parent=1 // pred_check
      _
    $region43: #{tpu_custom_call.1} parent=1 // pred_check_branch
      %310 = sbr.rel (0) target = $region45
    $region44: #{tpu_custom_call.1} parent=1 // pred_region
      %s312 = ssub.s32 256, 256
      %313 = vsyncadd [#allocation4], %s312
      %s314 = sshll.u32 [#allocation11], 4
      %s315 = int_to_ptr.vmem [resolvable:$true] %s314
      %320 = dma.vmem_to_hbm [thread:$0]  %s315, 256, %s5, [#allocation4], 128, 128, 8
    $region45: #{tpu_custom_call.1} parent=1 // pred_fallthru
      _
    // Predicated region
    $region46: #{tpu_custom_call.1} parent=1 // pred_check
      _
    $region47: #{tpu_custom_call.1} parent=1 // pred_check_branch
      %322 = sbr.rel (0) target = $region49
    $region48: #{tpu_custom_call.1} parent=1 // pred_region
      %323 = dma.done [#allocation4], 256
    $region49: #{tpu_custom_call.1} parent=1 // pred_fallthru
      _
    %324 = vsyncpa [#allocation3], 1
    %325 = vsyncpa [#allocation6], 1
    %326 = vsyncpa [#allocation9], 1
    %327 = vsyncpa [#allocation4], 1

</llo_original>
